<compile_context>
chip_gen: v7x
topology: tpu7x:2x2x1
jax: 0.10.0
libtpu: 0.0.40
codegen_flags: <defaults>
</compile_context>

<pallas_src>
import functools

import jax
import jax.numpy as jnp
from jax.experimental import pallas as pl
from jax.experimental.pallas import tpu as pltpu


def _round_up(n, m):
    return ((n + m - 1) // m) * m


def cmgn_kernel(x_ref, wv_ref, wt_ref, vt_ref, biases_ref, bl_ref, out_ref, *,
                num_layers, hp):
    x = x_ref[...]            # [TB, DP]      (mxu dtype)
    wv = wv_ref[...]          # [DP, HP+OP]   (= [W | V], zero padded)
    wt = wt_ref[...]          # [HP, DP]      (W^T, zero padded)
    vt = vt_ref[...]          # [OP, DP]      (V^T, zero padded)
    b = biases_ref[...]       # [LP, HP] f32  (hoisted load; rows 0..L-1 valid)
    bl = bl_ref[...]          # [8,  DP] f32  (row 0 valid)

    # Fused forward matmul: one MXU pass gives both x@W and x@V (f32 acc).
    xwv = jnp.dot(x, wv, preferred_element_type=jnp.float32)     # [TB, HP+OP]
    xw = xwv[:, :hp]          # [TB, HP]  lane-tile aligned slice (HP % 128 == 0)
    xv = xwv[:, hp:]          # [TB, OP]

    # V path is independent of the recurrence: issue its MXU pass now so the
    # scheduler can hide it under the serial EUP tanh chain below.
    inter2 = jnp.dot(xv.astype(vt.dtype), vt,
                     preferred_element_type=jnp.float32)          # [TB, DP]

    # Layer recurrence  z_0 = xw + b_0 ; z_l = xw + sigmoid(z_{l-1}) + b_l,
    # rescaled as u_l = 0.5*z_l so each serial link is tanh -> *0.25 -> +c_l,
    # with c_l = 0.5*xw + 0.5*b_l + 0.25 precomputed off the chain.
    half_xw = 0.5 * xw
    u = half_xw + 0.5 * b[0, :][None, :]
    for l in range(1, num_layers):          # static L -> unrolled
        # TODO(synk): switch to lax.fori_loop reading b_ref[l] if num_layers
        # grows beyond ~16 (keeps code size / vreg pressure flat).
        c_l = half_xw + (0.5 * b[l, :][None, :] + 0.25)
        u = c_l + 0.25 * jnp.tanh(u)
    sig_z = 0.5 * jnp.tanh(u) + 0.5         # = sigmoid(z_{L-1})

    # W path: sigmoid(z) @ W^T.  Padded hidden lanes of sig_z are nonzero
    # (sigmoid of padding), but rows [H:HP] of wt are exactly zero in the
    # wrapper so they contribute nothing — keep that invariant.
    inter1 = jnp.dot(sig_z.astype(wt.dtype), wt,
                     preferred_element_type=jnp.float32)          # [TB, DP]

    out_ref[...] = (inter1 + inter2 + bl[0:1, :]).astype(out_ref.dtype)


def cmgn_forward(x, W, V, biases, bL, *, num_layers, mxu_dtype=jnp.bfloat16):
    B, D = x.shape
    H = W.shape[1]
    O = V.shape[1]
    assert W.shape[0] == D and V.shape[0] == D
    assert biases.shape == (num_layers, H)

    f32 = jnp.float32

    # Lane-dense padded feature dims (zero padding is inert for every term;
    # see the invariant comment in the kernel).
    DP = _round_up(D, 128)
    HP = _round_up(H, 128)
    OP = _round_up(O, 128)
    LP = _round_up(num_layers, 8)

    # Batch tiling:
    #   * very large batches -> 512-row tiles (MXU fill, low per-step overhead)
    #   * mid-size batches   -> >= 2 grid steps so both v7x TCs get work
    #   * tiny batches       -> one sublane-aligned tile
    if B >= 1024:
        TB = 512
    elif B > 8:
        TB = _round_up(pl.cdiv(B, 2), 8)
    else:
        TB = _round_up(max(B, 1), 8)
    BP = _round_up(B, TB)

    # ---- one-time XLA-side layout work (outside the kernel) ----------------
    xp = jnp.zeros((BP, DP), mxu_dtype).at[:B, :D].set(x.astype(mxu_dtype))

    wv = jnp.zeros((DP, HP + OP), mxu_dtype)
    wv = wv.at[:D, :H].set(W.astype(mxu_dtype))
    wv = wv.at[:D, HP:HP + O].set(V.astype(mxu_dtype))

    wt = jnp.zeros((HP, DP), mxu_dtype).at[:H, :D].set(W.T.astype(mxu_dtype))
    vt = jnp.zeros((OP, DP), mxu_dtype).at[:O, :D].set(V.T.astype(mxu_dtype))
    # TODO(synk): for very large D/H on v7x, stream weights over a K grid axis
    # (or use a transposed-RHS matmul against wv) instead of keeping both the
    # forward and transposed copies resident simultaneously.

    bp = jnp.zeros((LP, HP), f32).at[:num_layers, :H].set(biases.astype(f32))

    # final broadcast (as in the PyTorch module) requires output_dim == input_dim
    bl_row = jnp.broadcast_to(jnp.reshape(bL.astype(f32), (1, -1)), (1, D))
    blp = jnp.zeros((8, DP), f32).at[0:1, :D].set(bl_row)
    # ------------------------------------------------------------------------

    kernel = functools.partial(cmgn_kernel, num_layers=num_layers, hp=HP)

    def build_and_call(single_buffer_invariants):
        if single_buffer_invariants:
            mode = pl.Buffered(1)     # invariant blocks: no double-buffering

            def resident(shape):
                return pl.BlockSpec(shape, lambda i: (0, 0), pipeline_mode=mode)
        else:
            def resident(shape):
                return pl.BlockSpec(shape, lambda i: (0, 0))

        return pl.pallas_call(
            kernel,
            out_shape=jax.ShapeDtypeStruct((BP, DP), f32),
            grid_spec=pltpu.PrefetchScalarGridSpec(
                num_scalar_prefetch=0,
                grid=(BP // TB,),
                in_specs=[
                    pl.BlockSpec((TB, DP), lambda i: (i, 0)),   # x: batch-tiled
                    resident((DP, HP + OP)),                    # [W | V]
                    resident((HP, DP)),                         # W^T
                    resident((OP, DP)),                         # V^T
                    resident((LP, HP)),                         # biases
                    resident((8, DP)),                          # bL
                ],
                out_specs=pl.BlockSpec((TB, DP), lambda i: (i, 0)),
            ),
            compiler_params=pltpu.CompilerParams(
                dimension_semantics=("parallel",),
                # Headroom over the 16/32 MiB scoped defaults, still under
                # v7x's 64 MiB physical VMEM.
                vmem_limit_bytes=48 * 1024 * 1024,
            ),
        )(xp, wv, wt, vt, bp, blp)

    try:
        out_padded = build_and_call(True)
    except Exception:
        # Fallback for jax builds that reject pl.Buffered(1) on an input spec.
        out_padded = build_and_call(False)

    return out_padded[:B, :D]


def cmgn_reference(x, W, V, biases, bL, *, num_layers):
    xw = x @ W
    z = xw + biases[0]
    for l in range(1, num_layers):
        z = xw + jax.nn.sigmoid(z) + biases[l]
    inter_1 = jax.nn.sigmoid(z) @ W.T
    inter_2 = (x @ V) @ V.T
    return inter_1 + inter_2 + bL


if __name__ == "__main__":
    # Small shapes consistent with the module (output_dim == input_dim so the
    # final `+ bL` broadcast is valid, same constraint as the PyTorch code).
    batch = 8
    input_dim = 16
    hidden_dim = 32
    output_dim = 16
    num_layers = 3

    key = jax.random.PRNGKey(0)
    kx, kw, kv, kb, kbl = jax.random.split(key, 5)

    x = jax.random.normal(kx, (batch, input_dim), dtype=jnp.float32)
    W = jax.random.normal(kw, (input_dim, hidden_dim), dtype=jnp.float32)
    V = jax.random.normal(kv, (input_dim, output_dim), dtype=jnp.float32)
    biases = jax.random.normal(kb, (num_layers, hidden_dim), dtype=jnp.float32)
    bL = jax.random.normal(kbl, (output_dim,), dtype=jnp.float32)

    ref = cmgn_reference(x, W, V, biases, bL, num_layers=num_layers)

    # f32-MXU verification path: tight elementwise check.
    out_f32 = cmgn_forward(x, W, V, biases, bL, num_layers=num_layers,
                           mxu_dtype=jnp.float32)
    out_f32 = jax.block_until_ready(out_f32)
    assert out_f32.shape == ref.shape
    assert jnp.allclose(out_f32, ref, atol=1e-4, rtol=1e-4), "f32 path mismatch"

    # bf16-MXU path (perf default): f32 accumulation, bf16 input rounding, so
    # use a norm-based check at a bf16-appropriate tolerance.
    out_bf16 = cmgn_forward(x, W, V, biases, bL, num_layers=num_layers)
    out_bf16 = jax.block_until_ready(out_bf16)
    rel_err = jnp.linalg.norm(out_bf16 - ref) / jnp.linalg.norm(ref)
    assert out_bf16.shape == ref.shape
    assert float(rel_err) < 2e-2, f"bf16 path rel error too large: {rel_err}"

    print("KERNEL_OK")
</pallas_src>

<mosaic_0001>
module attributes {stable_mosaic.version = 11 : i64} {
  func.func @cmgn_kernel(%arg0: i32, %arg1: memref<8x128xf32, #tpu.memory_space<vmem>>, %arg2: memref<128x256xf32, #tpu.memory_space<vmem>>, %arg3: memref<128x128xf32, #tpu.memory_space<vmem>>, %arg4: memref<128x128xf32, #tpu.memory_space<vmem>>, %arg5: memref<8x128xf32, #tpu.memory_space<vmem>>, %arg6: memref<8x128xf32, #tpu.memory_space<vmem>>, %arg7: memref<8x128xf32, #tpu.memory_space<vmem>>) attributes {dimension_semantics = [#tpu.dimension_semantics<parallel>], iteration_bounds = array<i64: 1>, scalar_prefetch = 0 : i64, scratch_operands = 0 : i64, tpu.core_type = #tpu.core_type<tc>, window_params = [{transform_indices = @transform_0, window_bounds = array<i64: 8, 128>}, {pipeline_mode = #tpu.pipeline_mode<synchronous>, transform_indices = @transform_1, window_bounds = array<i64: 128, 256>}, {pipeline_mode = #tpu.pipeline_mode<synchronous>, transform_indices = @transform_2, window_bounds = array<i64: 128, 128>}, {pipeline_mode = #tpu.pipeline_mode<synchronous>, transform_indices = @transform_3, window_bounds = array<i64: 128, 128>}, {pipeline_mode = #tpu.pipeline_mode<synchronous>, transform_indices = @transform_4, window_bounds = array<i64: 8, 128>}, {pipeline_mode = #tpu.pipeline_mode<synchronous>, transform_indices = @transform_5, window_bounds = array<i64: 8, 128>}, {transform_indices = @transform_6, window_bounds = array<i64: 8, 128>}]} {
    %c0 = arith.constant 0 : index
    %c0_0 = arith.constant 0 : index
    %0 = vector.load %arg1[%c0, %c0_0] : memref<8x128xf32, #tpu.memory_space<vmem>>, vector<8x128xf32>
    %c0_1 = arith.constant 0 : index
    %c0_2 = arith.constant 0 : index
    %1 = vector.load %arg2[%c0_1, %c0_2] : memref<128x256xf32, #tpu.memory_space<vmem>>, vector<128x256xf32>
    %c0_3 = arith.constant 0 : index
    %c0_4 = arith.constant 0 : index
    %2 = vector.load %arg3[%c0_3, %c0_4] : memref<128x128xf32, #tpu.memory_space<vmem>>, vector<128x128xf32>
    %c0_5 = arith.constant 0 : index
    %c0_6 = arith.constant 0 : index
    %3 = vector.load %arg4[%c0_5, %c0_6] : memref<128x128xf32, #tpu.memory_space<vmem>>, vector<128x128xf32>
    %c0_7 = arith.constant 0 : index
    %c0_8 = arith.constant 0 : index
    %4 = vector.load %arg5[%c0_7, %c0_8] : memref<8x128xf32, #tpu.memory_space<vmem>>, vector<8x128xf32>
    %c0_9 = arith.constant 0 : index
    %c0_10 = arith.constant 0 : index
    %5 = vector.load %arg6[%c0_9, %c0_10] : memref<8x128xf32, #tpu.memory_space<vmem>>, vector<8x128xf32>
    %cst = arith.constant dense<0.000000e+00> : vector<8x256xf32>
    %6 = tpu.matmul %0, %1, %cst {dimension_numbers = #tpu.dot_dimension_numbers<[1], [0], [0], [1], [0, 0, 1, 1], [], []>} : vector<8x128xf32>, vector<128x256xf32>, vector<8x256xf32> -> vector<8x256xf32>
    %7 = vector.extract_strided_slice %6 {offsets = [0, 0], sizes = [8, 128], strides = [1, 1]} : vector<8x256xf32> to vector<8x128xf32>
    %8 = vector.extract_strided_slice %6 {offsets = [0, 128], sizes = [8, 128], strides = [1, 1]} : vector<8x256xf32> to vector<8x128xf32>
    %cst_11 = arith.constant dense<0.000000e+00> : vector<8x128xf32>
    %9 = tpu.matmul %8, %3, %cst_11 {dimension_numbers = #tpu.dot_dimension_numbers<[1], [0], [0], [1], [0, 0, 1, 1], [], []>} : vector<8x128xf32>, vector<128x128xf32>, vector<8x128xf32> -> vector<8x128xf32>
    %cst_12 = arith.constant 5.000000e-01 : f32
    %10 = vector.broadcast %cst_12 : f32 to vector<8x128xf32>
    %11 = arith.mulf %10, %7 : vector<8x128xf32>
    %12 = vector.extract_strided_slice %4 {offsets = [0, 0], sizes = [1, 128], strides = [1, 1]} : vector<8x128xf32> to vector<1x128xf32>
    %13 = vector.shape_cast %12 : vector<1x128xf32> to vector<128xf32>
    %14 = vector.shape_cast %13 : vector<128xf32> to vector<1x128xf32>
    %cst_13 = arith.constant 5.000000e-01 : f32
    %15 = vector.broadcast %cst_13 : f32 to vector<1x128xf32>
    %16 = arith.mulf %15, %14 : vector<1x128xf32>
    %17 = vector.broadcast %16 : vector<1x128xf32> to vector<8x128xf32>
    %18 = arith.addf %11, %17 : vector<8x128xf32>
    %19 = vector.extract_strided_slice %4 {offsets = [1, 0], sizes = [1, 128], strides = [1, 1]} : vector<8x128xf32> to vector<1x128xf32>
    %20 = vector.shape_cast %19 : vector<1x128xf32> to vector<128xf32>
    %21 = vector.shape_cast %20 : vector<128xf32> to vector<1x128xf32>
    %cst_14 = arith.constant 5.000000e-01 : f32
    %22 = vector.broadcast %cst_14 : f32 to vector<1x128xf32>
    %23 = arith.mulf %22, %21 : vector<1x128xf32>
    %cst_15 = arith.constant 2.500000e-01 : f32
    %24 = vector.broadcast %cst_15 : f32 to vector<1x128xf32>
    %25 = arith.addf %23, %24 : vector<1x128xf32>
    %26 = vector.broadcast %25 : vector<1x128xf32> to vector<8x128xf32>
    %27 = arith.addf %11, %26 : vector<8x128xf32>
    %28 = math.tanh %18 : vector<8x128xf32>
    %cst_16 = arith.constant 2.500000e-01 : f32
    %29 = vector.broadcast %cst_16 : f32 to vector<8x128xf32>
    %30 = arith.mulf %29, %28 : vector<8x128xf32>
    %31 = arith.addf %27, %30 : vector<8x128xf32>
    %32 = vector.extract_strided_slice %4 {offsets = [2, 0], sizes = [1, 128], strides = [1, 1]} : vector<8x128xf32> to vector<1x128xf32>
    %33 = vector.shape_cast %32 : vector<1x128xf32> to vector<128xf32>
    %34 = vector.shape_cast %33 : vector<128xf32> to vector<1x128xf32>
    %cst_17 = arith.constant 5.000000e-01 : f32
    %35 = vector.broadcast %cst_17 : f32 to vector<1x128xf32>
    %36 = arith.mulf %35, %34 : vector<1x128xf32>
    %cst_18 = arith.constant 2.500000e-01 : f32
    %37 = vector.broadcast %cst_18 : f32 to vector<1x128xf32>
    %38 = arith.addf %36, %37 : vector<1x128xf32>
    %39 = vector.broadcast %38 : vector<1x128xf32> to vector<8x128xf32>
    %40 = arith.addf %11, %39 : vector<8x128xf32>
    %41 = math.tanh %31 : vector<8x128xf32>
    %cst_19 = arith.constant 2.500000e-01 : f32
    %42 = vector.broadcast %cst_19 : f32 to vector<8x128xf32>
    %43 = arith.mulf %42, %41 : vector<8x128xf32>
    %44 = arith.addf %40, %43 : vector<8x128xf32>
    %45 = math.tanh %44 : vector<8x128xf32>
    %cst_20 = arith.constant 5.000000e-01 : f32
    %46 = vector.broadcast %cst_20 : f32 to vector<8x128xf32>
    %47 = arith.mulf %46, %45 : vector<8x128xf32>
    %cst_21 = arith.constant 5.000000e-01 : f32
    %48 = vector.broadcast %cst_21 : f32 to vector<8x128xf32>
    %49 = arith.addf %47, %48 : vector<8x128xf32>
    %cst_22 = arith.constant dense<0.000000e+00> : vector<8x128xf32>
    %50 = tpu.matmul %49, %2, %cst_22 {dimension_numbers = #tpu.dot_dimension_numbers<[1], [0], [0], [1], [0, 0, 1, 1], [], []>} : vector<8x128xf32>, vector<128x128xf32>, vector<8x128xf32> -> vector<8x128xf32>
    %51 = arith.addf %50, %9 : vector<8x128xf32>
    %52 = vector.extract_strided_slice %5 {offsets = [0, 0], sizes = [1, 128], strides = [1, 1]} : vector<8x128xf32> to vector<1x128xf32>
    %53 = vector.broadcast %52 : vector<1x128xf32> to vector<8x128xf32>
    %54 = arith.addf %51, %53 : vector<8x128xf32>
    %c0_23 = arith.constant 0 : index
    %c0_24 = arith.constant 0 : index
    %55 = vector.load %arg7[%c0_23, %c0_24] : memref<8x128xf32, #tpu.memory_space<vmem>>, vector<8x128xf32>
    tpu.vector_store %arg7[%c0_23, %c0_24], %54 {strides = array<i32>} : memref<8x128xf32, #tpu.memory_space<vmem>>, vector<8x128xf32>,
    return
  }
  func.func @transform_0(%arg0: i32) -> (i32, i32) {
    %c0_i32 = arith.constant 0 : i32
    %c0_i32_0 = arith.constant 0 : i32
    return %arg0, %c0_i32 : i32, i32
  }
  func.func @transform_1(%arg0: i32) -> (i32, i32) {
    %c0_i32 = arith.constant 0 : i32
    %c0_i32_0 = arith.constant 0 : i32
    %c0_i32_1 = arith.constant 0 : i32
    return %c0_i32, %c0_i32_0 : i32, i32
  }
  func.func @transform_2(%arg0: i32) -> (i32, i32) {
    %c0_i32 = arith.constant 0 : i32
    %c0_i32_0 = arith.constant 0 : i32
    %c0_i32_1 = arith.constant 0 : i32
    return %c0_i32, %c0_i32_0 : i32, i32
  }
  func.func @transform_3(%arg0: i32) -> (i32, i32) {
    %c0_i32 = arith.constant 0 : i32
    %c0_i32_0 = arith.constant 0 : i32
    %c0_i32_1 = arith.constant 0 : i32
    return %c0_i32, %c0_i32_0 : i32, i32
  }
  func.func @transform_4(%arg0: i32) -> (i32, i32) {
    %c0_i32 = arith.constant 0 : i32
    %c0_i32_0 = arith.constant 0 : i32
    %c0_i32_1 = arith.constant 0 : i32
    return %c0_i32, %c0_i32_0 : i32, i32
  }
  func.func @transform_5(%arg0: i32) -> (i32, i32) {
    %c0_i32 = arith.constant 0 : i32
    %c0_i32_0 = arith.constant 0 : i32
    %c0_i32_1 = arith.constant 0 : i32
    return %c0_i32, %c0_i32_0 : i32, i32
  }
  func.func @transform_6(%arg0: i32) -> (i32, i32) {
    %c0_i32 = arith.constant 0 : i32
    %c0_i32_0 = arith.constant 0 : i32
    return %arg0, %c0_i32 : i32, i32
  }
}

module attributes {stable_mosaic.version = 11 : i64} {
  func.func @cmgn_kernel(%arg0: i32, %arg1: memref<8x128xf32, #tpu.memory_space<vmem>>, %arg2: memref<128x256xf32, #tpu.memory_space<vmem>>, %arg3: memref<128x128xf32, #tpu.memory_space<vmem>>, %arg4: memref<128x128xf32, #tpu.memory_space<vmem>>, %arg5: memref<8x128xf32, #tpu.memory_space<vmem>>, %arg6: memref<8x128xf32, #tpu.memory_space<vmem>>, %arg7: memref<8x128xf32, #tpu.memory_space<vmem>>) attributes {dimension_semantics = [#tpu.dimension_semantics<parallel>], iteration_bounds = array<i64: 1>, scalar_prefetch = 0 : i64, scratch_operands = 0 : i64, tpu.core_type = #tpu.core_type<tc>, window_params = [{transform_indices = @transform_0, window_bounds = array<i64: 8, 128>}, {pipeline_mode = #tpu.pipeline_mode<synchronous>, transform_indices = @transform_1, window_bounds = array<i64: 128, 256>}, {pipeline_mode = #tpu.pipeline_mode<synchronous>, transform_indices = @transform_2, window_bounds = array<i64: 128, 128>}, {pipeline_mode = #tpu.pipeline_mode<synchronous>, transform_indices = @transform_3, window_bounds = array<i64: 128, 128>}, {pipeline_mode = #tpu.pipeline_mode<synchronous>, transform_indices = @transform_4, window_bounds = array<i64: 8, 128>}, {pipeline_mode = #tpu.pipeline_mode<synchronous>, transform_indices = @transform_5, window_bounds = array<i64: 8, 128>}, {transform_indices = @transform_6, window_bounds = array<i64: 8, 128>}]} {
    %c0 = arith.constant 0 : index
    %c0_0 = arith.constant 0 : index
    %0 = vector.load %arg1[%c0, %c0_0] : memref<8x128xf32, #tpu.memory_space<vmem>>, vector<8x128xf32>
    %c0_1 = arith.constant 0 : index
    %c0_2 = arith.constant 0 : index
    %1 = vector.load %arg2[%c0_1, %c0_2] : memref<128x256xf32, #tpu.memory_space<vmem>>, vector<128x256xf32>
    %c0_3 = arith.constant 0 : index
    %c0_4 = arith.constant 0 : index
    %2 = vector.load %arg3[%c0_3, %c0_4] : memref<128x128xf32, #tpu.memory_space<vmem>>, vector<128x128xf32>
    %c0_5 = arith.constant 0 : index
    %c0_6 = arith.constant 0 : index
    %3 = vector.load %arg4[%c0_5, %c0_6] : memref<128x128xf32, #tpu.memory_space<vmem>>, vector<128x128xf32>
    %c0_7 = arith.constant 0 : index
    %c0_8 = arith.constant 0 : index
    %4 = vector.load %arg5[%c0_7, %c0_8] : memref<8x128xf32, #tpu.memory_space<vmem>>, vector<8x128xf32>
    %c0_9 = arith.constant 0 : index
    %c0_10 = arith.constant 0 : index
    %5 = vector.load %arg6[%c0_9, %c0_10] : memref<8x128xf32, #tpu.memory_space<vmem>>, vector<8x128xf32>
    %cst = arith.constant dense<0.000000e+00> : vector<8x256xf32>
    %6 = tpu.matmul %0, %1, %cst {dimension_numbers = #tpu.dot_dimension_numbers<[1], [0], [0], [1], [0, 0, 1, 1], [], []>} : vector<8x128xf32>, vector<128x256xf32>, vector<8x256xf32> -> vector<8x256xf32>
    %7 = vector.extract_strided_slice %6 {offsets = [0, 0], sizes = [8, 128], strides = [1, 1]} : vector<8x256xf32> to vector<8x128xf32>
    %8 = vector.extract_strided_slice %6 {offsets = [0, 128], sizes = [8, 128], strides = [1, 1]} : vector<8x256xf32> to vector<8x128xf32>
    %cst_11 = arith.constant dense<0.000000e+00> : vector<8x128xf32>
    %9 = tpu.matmul %8, %3, %cst_11 {dimension_numbers = #tpu.dot_dimension_numbers<[1], [0], [0], [1], [0, 0, 1, 1], [], []>} : vector<8x128xf32>, vector<128x128xf32>, vector<8x128xf32> -> vector<8x128xf32>
    %cst_12 = arith.constant 5.000000e-01 : f32
    %10 = vector.broadcast %cst_12 : f32 to vector<8x128xf32>
    %11 = arith.mulf %10, %7 : vector<8x128xf32>
    %12 = vector.extract_strided_slice %4 {offsets = [0, 0], sizes = [1, 128], strides = [1, 1]} : vector<8x128xf32> to vector<1x128xf32>
    %13 = vector.shape_cast %12 : vector<1x128xf32> to vector<128xf32>
    %14 = vector.shape_cast %13 : vector<128xf32> to vector<1x128xf32>
    %cst_13 = arith.constant 5.000000e-01 : f32
    %15 = vector.broadcast %cst_13 : f32 to vector<1x128xf32>
    %16 = arith.mulf %15, %14 : vector<1x128xf32>
    %17 = vector.broadcast %16 : vector<1x128xf32> to vector<8x128xf32>
    %18 = arith.addf %11, %17 : vector<8x128xf32>
    %19 = vector.extract_strided_slice %4 {offsets = [1, 0], sizes = [1, 128], strides = [1, 1]} : vector<8x128xf32> to vector<1x128xf32>
    %20 = vector.shape_cast %19 : vector<1x128xf32> to vector<128xf32>
    %21 = vector.shape_cast %20 : vector<128xf32> to vector<1x128xf32>
    %cst_14 = arith.constant 5.000000e-01 : f32
    %22 = vector.broadcast %cst_14 : f32 to vector<1x128xf32>
    %23 = arith.mulf %22, %21 : vector<1x128xf32>
    %cst_15 = arith.constant 2.500000e-01 : f32
    %24 = vector.broadcast %cst_15 : f32 to vector<1x128xf32>
    %25 = arith.addf %23, %24 : vector<1x128xf32>
    %26 = vector.broadcast %25 : vector<1x128xf32> to vector<8x128xf32>
    %27 = arith.addf %11, %26 : vector<8x128xf32>
    %28 = math.tanh %18 : vector<8x128xf32>
    %cst_16 = arith.constant 2.500000e-01 : f32
    %29 = vector.broadcast %cst_16 : f32 to vector<8x128xf32>
    %30 = arith.mulf %29, %28 : vector<8x128xf32>
    %31 = arith.addf %27, %30 : vector<8x128xf32>
    %32 = vector.extract_strided_slice %4 {offsets = [2, 0], sizes = [1, 128], strides = [1, 1]} : vector<8x128xf32> to vector<1x128xf32>
    %33 = vector.shape_cast %32 : vector<1x128xf32> to vector<128xf32>
    %34 = vector.shape_cast %33 : vector<128xf32> to vector<1x128xf32>
    %cst_17 = arith.constant 5.000000e-01 : f32
    %35 = vector.broadcast %cst_17 : f32 to vector<1x128xf32>
    %36 = arith.mulf %35, %34 : vector<1x128xf32>
    %cst_18 = arith.constant 2.500000e-01 : f32
    %37 = vector.broadcast %cst_18 : f32 to vector<1x128xf32>
    %38 = arith.addf %36, %37 : vector<1x128xf32>
    %39 = vector.broadcast %38 : vector<1x128xf32> to vector<8x128xf32>
    %40 = arith.addf %11, %39 : vector<8x128xf32>
    %41 = math.tanh %31 : vector<8x128xf32>
    %cst_19 = arith.constant 2.500000e-01 : f32
    %42 = vector.broadcast %cst_19 : f32 to vector<8x128xf32>
    %43 = arith.mulf %42, %41 : vector<8x128xf32>
    %44 = arith.addf %40, %43 : vector<8x128xf32>
    %45 = math.tanh %44 : vector<8x128xf32>
    %cst_20 = arith.constant 5.000000e-01 : f32
    %46 = vector.broadcast %cst_20 : f32 to vector<8x128xf32>
    %47 = arith.mulf %46, %45 : vector<8x128xf32>
    %cst_21 = arith.constant 5.000000e-01 : f32
    %48 = vector.broadcast %cst_21 : f32 to vector<8x128xf32>
    %49 = arith.addf %47, %48 : vector<8x128xf32>
    %cst_22 = arith.constant dense<0.000000e+00> : vector<8x128xf32>
    %50 = tpu.matmul %49, %2, %cst_22 {dimension_numbers = #tpu.dot_dimension_numbers<[1], [0], [0], [1], [0, 0, 1, 1], [], []>} : vector<8x128xf32>, vector<128x128xf32>, vector<8x128xf32> -> vector<8x128xf32>
    %51 = arith.addf %50, %9 : vector<8x128xf32>
    %52 = vector.extract_strided_slice %5 {offsets = [0, 0], sizes = [1, 128], strides = [1, 1]} : vector<8x128xf32> to vector<1x128xf32>
    %53 = vector.broadcast %52 : vector<1x128xf32> to vector<8x128xf32>
    %54 = arith.addf %51, %53 : vector<8x128xf32>
    %c0_23 = arith.constant 0 : index
    %c0_24 = arith.constant 0 : index
    %55 = vector.load %arg7[%c0_23, %c0_24] : memref<8x128xf32, #tpu.memory_space<vmem>>, vector<8x128xf32>
    tpu.vector_store %arg7[%c0_23, %c0_24], %54 {strides = array<i32>} : memref<8x128xf32, #tpu.memory_space<vmem>>, vector<8x128xf32>,
    return
  }
  func.func @transform_0(%arg0: i32) -> (i32, i32) {
    %c0_i32 = arith.constant 0 : i32
    %c0_i32_0 = arith.constant 0 : i32
    return %arg0, %c0_i32 : i32, i32
  }
  func.func @transform_1(%arg0: i32) -> (i32, i32) {
    %c0_i32 = arith.constant 0 : i32
    %c0_i32_0 = arith.constant 0 : i32
    %c0_i32_1 = arith.constant 0 : i32
    return %c0_i32, %c0_i32_0 : i32, i32
  }
  func.func @transform_2(%arg0: i32) -> (i32, i32) {
    %c0_i32 = arith.constant 0 : i32
    %c0_i32_0 = arith.constant 0 : i32
    %c0_i32_1 = arith.constant 0 : i32
    return %c0_i32, %c0_i32_0 : i32, i32
  }
  func.func @transform_3(%arg0: i32) -> (i32, i32) {
    %c0_i32 = arith.constant 0 : i32
    %c0_i32_0 = arith.constant 0 : i32
    %c0_i32_1 = arith.constant 0 : i32
    return %c0_i32, %c0_i32_0 : i32, i32
  }
  func.func @transform_4(%arg0: i32) -> (i32, i32) {
    %c0_i32 = arith.constant 0 : i32
    %c0_i32_0 = arith.constant 0 : i32
    %c0_i32_1 = arith.constant 0 : i32
    return %c0_i32, %c0_i32_0 : i32, i32
  }
  func.func @transform_5(%arg0: i32) -> (i32, i32) {
    %c0_i32 = arith.constant 0 : i32
    %c0_i32_0 = arith.constant 0 : i32
    %c0_i32_1 = arith.constant 0 : i32
    return %c0_i32, %c0_i32_0 : i32, i32
  }
  func.func @transform_6(%arg0: i32) -> (i32, i32) {
    %c0_i32 = arith.constant 0 : i32
    %c0_i32_0 = arith.constant 0 : i32
    return %arg0, %c0_i32 : i32, i32
  }
}

</mosaic_0001>

<llo_original>
// kernel: tpu_custom_call.1
$region0: #{tpu_custom_call.1}
  #allocation0 [shape = 'u32[]', space=smem, size = 0x4, offset = 0x4, fixed_abs, tag = 'smem constant byte address 0x4 - core index']
  #allocation1 [shape = 'u32[144,128]{1,0:T(1,128)}', space=vmem, size = 0x12000, scoped, tag = 'internal scratch']
  %s0 = inlined_call_operand.hbm [shape: f32[8,128], index: 0, kind: input, shape index: {}]
  %s1 = inlined_call_operand.hbm [shape: f32[128,256], index: 1, kind: input, shape index: {}]
  %s2 = inlined_call_operand.hbm [shape: f32[128,128], index: 2, kind: input, shape index: {}]
  %s3 = inlined_call_operand.hbm [shape: f32[128,128], index: 3, kind: input, shape index: {}]
  %s4 = inlined_call_operand.vmem [shape: f32[8,128], index: 4, kind: input, shape index: {}]
  %s5 = inlined_call_operand.vmem [shape: f32[8,128], index: 5, kind: input, shape index: {}]
  %s6 = inlined_call_operand.hbm [shape: f32[8,128], index: 6, kind: output, shape index: {}]
  %s7 = sld [smem:[#allocation0]]
  $region50: #{tpu_custom_call.1} parent=0
    _
  %s9 = ssub.s32 1, %s7
  %s10 = scalar_select 0, %s9, %s7
  $region1: #{tpu_custom_call.1} parent=0
    #allocation2 [shape = 'u8[4096]{0}', space=vmem, size = 0x1000, scoped, tag = 'input window, operand 0, single buffered']
    #allocation3 [shape = 's32[1]{0}', space=sflag, size = 0x4, scoped, tag = 'scoped memory for tpu_custom_call.1']
    #allocation4 [shape = 's32[1]{0}', space=sflag, size = 0x4, scoped, tag = 'scoped memory for tpu_custom_call.1']
    #allocation5 [shape = 'u8[131072]{0}', space=vmem, size = 0x20000, scoped, tag = 'input window, operand 1, single buffered']
    #allocation6 [shape = 's32[1]{0}', space=sflag, size = 0x4, scoped, tag = 'scoped memory for tpu_custom_call.1']
    #allocation7 [shape = 'u8[65536]{0}', space=vmem, size = 0x10000, scoped, tag = 'input window, operand 2, single buffered']
    #allocation8 [shape = 'u8[65536]{0}', space=vmem, size = 0x10000, scoped, tag = 'input window, operand 3, single buffered']
    #allocation9 [shape = 's32[1]{0}', space=sflag, size = 0x4, scoped, tag = 'scoped memory for tpu_custom_call.1']
    #allocation10 [shape = 'u8[4096]{0}', space=vmem, size = 0x1000, scoped, tag = 'output window, operand 0, single buffered']
    %11 = vsyncpa [#allocation3], 0
    %12 = vsyncpa [#allocation6], 0
    %13 = vsyncpa [#allocation9], 0
    %14 = vsyncpa [#allocation4], 0
    // Predicated region
    $region2: #{tpu_custom_call.1} parent=1 // pred_check
      _
    $region3: #{tpu_custom_call.1} parent=1 // pred_check_branch
      %16 = sbr.rel (0) target = $region5
    $region4: #{tpu_custom_call.1} parent=1 // pred_region
      %s18 = ssub.s32 128, 128
      %19 = vsyncadd [#allocation3], %s18
      %s21 = sshll.u32 [#allocation2], 4
      %s22 = int_to_ptr.vmem [resolvable:$true] %s21
      %24 = dma.hbm_to_vmem [thread:$0]  %s0, 128, %s22, [#allocation3]
    $region5: #{tpu_custom_call.1} parent=1 // pred_fallthru
      _
    // Predicated region
    $region6: #{tpu_custom_call.1} parent=1 // pred_check
      _
    $region7: #{tpu_custom_call.1} parent=1 // pred_check_branch
      %26 = sbr.rel (0) target = $region9
    $region8: #{tpu_custom_call.1} parent=1 // pred_region
      %s28 = ssub.s32 4096, 4096
      %29 = vsyncadd [#allocation6], %s28
      %s30 = sshll.u32 [#allocation5], 4
      %s31 = int_to_ptr.vmem [resolvable:$true] %s30
      %36 = dma.hbm_to_vmem [thread:$0]  %s1, 4096, %s31, [#allocation6], 256, 256, 16
    $region9: #{tpu_custom_call.1} parent=1 // pred_fallthru
      _
    // Predicated region
    $region10: #{tpu_custom_call.1} parent=1 // pred_check
      _
    $region11: #{tpu_custom_call.1} parent=1 // pred_check_branch
      %38 = sbr.rel (0) target = $region13
    $region12: #{tpu_custom_call.1} parent=1 // pred_region
      %s40 = ssub.s32 2048, 2048
      %41 = vsyncadd [#allocation6], %s40
      %s42 = sshll.u32 [#allocation7], 4
      %s43 = int_to_ptr.vmem [resolvable:$true] %s42
      %48 = dma.hbm_to_vmem [thread:$0]  %s2, 2048, %s43, [#allocation6], 128, 128, 8
    $region13: #{tpu_custom_call.1} parent=1 // pred_fallthru
      _
    // Predicated region
    $region14: #{tpu_custom_call.1} parent=1 // pred_check
      _
    $region15: #{tpu_custom_call.1} parent=1 // pred_check_branch
      %50 = sbr.rel (0) target = $region17
    $region16: #{tpu_custom_call.1} parent=1 // pred_region
      %s52 = ssub.s32 2048, 2048
      %53 = vsyncadd [#allocation9], %s52
      %s54 = sshll.u32 [#allocation8], 4
      %s55 = int_to_ptr.vmem [resolvable:$true] %s54
      %60 = dma.hbm_to_vmem [thread:$0]  %s3, 2048, %s55, [#allocation9], 128, 128, 8
    $region17: #{tpu_custom_call.1} parent=1 // pred_fallthru
      _
    // Predicated region
    $region18: #{tpu_custom_call.1} parent=1 // pred_check
      _
    $region19: #{tpu_custom_call.1} parent=1 // pred_check_branch
      %62 = sbr.rel (0) target = $region21
    $region20: #{tpu_custom_call.1} parent=1 // pred_region
      _
    $region21: #{tpu_custom_call.1} parent=1 // pred_fallthru
      _
    // Predicated region
    $region22: #{tpu_custom_call.1} parent=1 // pred_check
      _
    $region23: #{tpu_custom_call.1} parent=1 // pred_check_branch
      %64 = sbr.rel (0) target = $region25
    $region24: #{tpu_custom_call.1} parent=1 // pred_region
      _
    $region25: #{tpu_custom_call.1} parent=1 // pred_fallthru
      _
    // Predicated region
    $region26: #{tpu_custom_call.1} parent=1 // pred_check
      _
    $region27: #{tpu_custom_call.1} parent=1 // pred_check_branch
      %66 = sbr.rel (0) target = $region29
    $region28: #{tpu_custom_call.1} parent=1 // pred_region
      %67 = dma.done [#allocation3], 128
    $region29: #{tpu_custom_call.1} parent=1 // pred_fallthru
      _
    // Predicated region
    $region30: #{tpu_custom_call.1} parent=1 // pred_check
      _
    $region31: #{tpu_custom_call.1} parent=1 // pred_check_branch
      %69 = sbr.rel (0) target = $region33
    $region32: #{tpu_custom_call.1} parent=1 // pred_region
      %70 = dma.done [#allocation6], 4096
    $region33: #{tpu_custom_call.1} parent=1 // pred_fallthru
      _
    // Predicated region
    $region34: #{tpu_custom_call.1} parent=1 // pred_check
      _
    $region35: #{tpu_custom_call.1} parent=1 // pred_check_branch
      %72 = sbr.rel (0) target = $region37
    $region36: #{tpu_custom_call.1} parent=1 // pred_region
      %73 = dma.done [#allocation6], 2048
    $region37: #{tpu_custom_call.1} parent=1 // pred_fallthru
      _
    // Predicated region
    $region38: #{tpu_custom_call.1} parent=1 // pred_check
      _
    $region39: #{tpu_custom_call.1} parent=1 // pred_check_branch
      %75 = sbr.rel (0) target = $region41
    $region40: #{tpu_custom_call.1} parent=1 // pred_region
      %76 = dma.done [#allocation9], 2048
    $region41: #{tpu_custom_call.1} parent=1 // pred_fallthru
      _
    %v77 = vld [vmem:[#allocation2] sm:$0xff]
    %v78 = vld [vmem:[#allocation5] sm:$0xff]
    %v79 = vld [vmem:[#allocation5 + $0x8] sm:$0xff]
    %v80 = vld [vmem:[#allocation5 + $0x10] sm:$0xff]
    %v81 = vld [vmem:[#allocation5 + $0x18] sm:$0xff]
    %v82 = vld [vmem:[#allocation5 + $0x20] sm:$0xff]
    %v83 = vld [vmem:[#allocation5 + $0x28] sm:$0xff]
    %v84 = vld [vmem:[#allocation5 + $0x30] sm:$0xff]
    %v85 = vld [vmem:[#allocation5 + $0x38] sm:$0xff]
    %v86 = vld [vmem:[#allocation5 + $0x40] sm:$0xff]
    %v87 = vld [vmem:[#allocation5 + $0x48] sm:$0xff]
    %v88 = vld [vmem:[#allocation5 + $0x50] sm:$0xff]
    %v89 = vld [vmem:[#allocation5 + $0x58] sm:$0xff]
    %v90 = vld [vmem:[#allocation5 + $0x60] sm:$0xff]
    %v91 = vld [vmem:[#allocation5 + $0x68] sm:$0xff]
    %v92 = vld [vmem:[#allocation5 + $0x70] sm:$0xff]
    %v93 = vld [vmem:[#allocation5 + $0x78] sm:$0xff]
    %v94 = vld [vmem:[#allocation5 + $0x80] sm:$0xff]
    %v95 = vld [vmem:[#allocation5 + $0x88] sm:$0xff]
    %v96 = vld [vmem:[#allocation5 + $0x90] sm:$0xff]
    %v97 = vld [vmem:[#allocation5 + $0x98] sm:$0xff]
    %v98 = vld [vmem:[#allocation5 + $0xa0] sm:$0xff]
    %v99 = vld [vmem:[#allocation5 + $0xa8] sm:$0xff]
    %v100 = vld [vmem:[#allocation5 + $0xb0] sm:$0xff]
    %v101 = vld [vmem:[#allocation5 + $0xb8] sm:$0xff]
    %v102 = vld [vmem:[#allocation5 + $0xc0] sm:$0xff]
    %v103 = vld [vmem:[#allocation5 + $0xc8] sm:$0xff]
    %v104 = vld [vmem:[#allocation5 + $0xd0] sm:$0xff]
    %v105 = vld [vmem:[#allocation5 + $0xd8] sm:$0xff]
    %v106 = vld [vmem:[#allocation5 + $0xe0] sm:$0xff]
    %v107 = vld [vmem:[#allocation5 + $0xe8] sm:$0xff]
    %v108 = vld [vmem:[#allocation5 + $0xf0] sm:$0xff]
    %v109 = vld [vmem:[#allocation5 + $0xf8] sm:$0xff]
    %v110 = vld [vmem:[#allocation7] sm:$0xff]
    %v111 = vld [vmem:[#allocation7 + $0x8] sm:$0xff]
    %v112 = vld [vmem:[#allocation7 + $0x10] sm:$0xff]
    %v113 = vld [vmem:[#allocation7 + $0x18] sm:$0xff]
    %v114 = vld [vmem:[#allocation7 + $0x20] sm:$0xff]
    %v115 = vld [vmem:[#allocation7 + $0x28] sm:$0xff]
    %v116 = vld [vmem:[#allocation7 + $0x30] sm:$0xff]
    %v117 = vld [vmem:[#allocation7 + $0x38] sm:$0xff]
    %v118 = vld [vmem:[#allocation7 + $0x40] sm:$0xff]
    %v119 = vld [vmem:[#allocation7 + $0x48] sm:$0xff]
    %v120 = vld [vmem:[#allocation7 + $0x50] sm:$0xff]
    %v121 = vld [vmem:[#allocation7 + $0x58] sm:$0xff]
    %v122 = vld [vmem:[#allocation7 + $0x60] sm:$0xff]
    %v123 = vld [vmem:[#allocation7 + $0x68] sm:$0xff]
    %v124 = vld [vmem:[#allocation7 + $0x70] sm:$0xff]
    %v125 = vld [vmem:[#allocation7 + $0x78] sm:$0xff]
    %v126 = vld [vmem:[#allocation8] sm:$0xff]
    %v127 = vld [vmem:[#allocation8 + $0x8] sm:$0xff]
    %v128 = vld [vmem:[#allocation8 + $0x10] sm:$0xff]
    %v129 = vld [vmem:[#allocation8 + $0x18] sm:$0xff]
    %v130 = vld [vmem:[#allocation8 + $0x20] sm:$0xff]
    %v131 = vld [vmem:[#allocation8 + $0x28] sm:$0xff]
    %v132 = vld [vmem:[#allocation8 + $0x30] sm:$0xff]
    %v133 = vld [vmem:[#allocation8 + $0x38] sm:$0xff]
    %v134 = vld [vmem:[#allocation8 + $0x40] sm:$0xff]
    %v135 = vld [vmem:[#allocation8 + $0x48] sm:$0xff]
    %v136 = vld [vmem:[#allocation8 + $0x50] sm:$0xff]
    %v137 = vld [vmem:[#allocation8 + $0x58] sm:$0xff]
    %v138 = vld [vmem:[#allocation8 + $0x60] sm:$0xff]
    %v139 = vld [vmem:[#allocation8 + $0x68] sm:$0xff]
    %v140 = vld [vmem:[#allocation8 + $0x70] sm:$0xff]
    %v141 = vld [vmem:[#allocation8 + $0x78] sm:$0xff]
    %v142 = vld [vmem:[%s4] sm:$0xff]
    %v143 = vld [vmem:[%s5] sm:$0xff]
    %144 = vmatprep.subr.mxu0 %v79
    %145 = vmatpush1.msra.mxu0 %v78
    %146 = vmatprep.subr.mxu0 %v81
    %147 = vmatpush1.msra.mxu0 %v80
    %148 = vmatprep.subr.mxu0 %v83
    %149 = vmatpush1.msra.mxu0 %v82
    %150 = vmatprep.subr.mxu0 %v85
    %151 = vmatpush1.msra.mxu0 %v84
    %152 = vmatprep.subr.mxu0 %v87
    %153 = vmatpush1.msra.mxu0 %v86
    %154 = vmatprep.subr.mxu0 %v89
    %155 = vmatpush1.msra.mxu0 %v88
    %156 = vmatprep.subr.mxu0 %v91
    %157 = vmatpush1.msra.mxu0 %v90
    %158 = vmatprep.subr.mxu0 %v93
    %159 = vmatpush1.msra.mxu0 %v92
    %160 = vmatprep.subr.mxu0 %v95
    %161 = vmatpush1.msra.mxu0 %v94
    %162 = vmatprep.subr.mxu0 %v97
    %163 = vmatpush1.msra.mxu0 %v96
    %164 = vmatprep.subr.mxu0 %v99
    %165 = vmatpush1.msra.mxu0 %v98
    %166 = vmatprep.subr.mxu0 %v101
    %167 = vmatpush1.msra.mxu0 %v100
    %168 = vmatprep.subr.mxu0 %v103
    %169 = vmatpush1.msra.mxu0 %v102
    %170 = vmatprep.subr.mxu0 %v105
    %171 = vmatpush1.msra.mxu0 %v104
    %172 = vmatprep.subr.mxu0 %v107
    %173 = vmatpush1.msra.mxu0 %v106
    %174 = vmatprep.subr.mxu0 %v109
    %175 = vmatpush1.msra.mxu0 %v108
    %176 = vmatprep.subr.mxu0 0.0
    %177 = vmatpush1.msra.mxu0 0.0
    %178 = vmatprep.subr.mxu0 0.0
    %179 = vmatpush1.msra.mxu0 0.0
    %180 = vmatprep.subr.mxu0 0.0
    %181 = vmatpush1.msra.mxu0 0.0
    %182 = vmatprep.subr.mxu0 0.0
    %183 = vmatpush1.msra.mxu0 0.0
    %184 = vmatprep.subr.mxu0 0.0
    %185 = vmatpush1.msra.mxu0 0.0
    %186 = vmatprep.subr.mxu0 0.0
    %187 = vmatpush1.msra.mxu0 0.0
    %188 = vmatprep.subr.mxu0 0.0
    %189 = vmatpush1.msra.mxu0 0.0
    %190 = vmatprep.subr.mxu0 0.0
    %191 = vmatpush1.msra.mxu0 0.0
    %192 = vmatprep.subr.mxu0 0.0
    %193 = vmatpush1.msra.mxu0 0.0
    %194 = vmatprep.subr.mxu0 0.0
    %195 = vmatpush1.msra.mxu0 0.0
    %196 = vmatprep.subr.mxu0 0.0
    %197 = vmatpush1.msra.mxu0 0.0
    %198 = vmatprep.subr.mxu0 0.0
    %199 = vmatpush1.msra.mxu0 0.0
    %200 = vmatprep.subr.mxu0 0.0
    %201 = vmatpush1.msra.mxu0 0.0
    %202 = vmatprep.subr.mxu0 0.0
    %203 = vmatpush1.msra.mxu0 0.0
    %204 = vmatprep.subr.mxu0 0.0
    %205 = vmatpush1.msra.mxu0 0.0
    %206 = vmatprep.subr.mxu0 0.0
    %207 = vmatpush1.msra.mxu0 0.0
    %208 = vmatprep.mubr.f32.mxu0 0.0
    %209 = vmatmul.mubr.f32.gmra.mrb[0].mxu0 %v77
    %v210 = vpop.f32.mrb[0].mxu0
    %v211 = vadd.f32 0.0, %v210
    %v212 = vpop.f32.mrb[0].mxu0
    %v213 = vadd.f32 0.0, %v212
    %214 = vdwg.mxu0
    %215 = vmatprep.subr.mxu0 0.0
    %216 = vmatpush1.msra.mxu0 %v126
    %217 = vmatprep.subr.mxu0 0.0
    %218 = vmatpush1.msra.mxu0 %v127
    %219 = vmatprep.subr.mxu0 0.0
    %220 = vmatpush1.msra.mxu0 %v128
    %221 = vmatprep.subr.mxu0 0.0
    %222 = vmatpush1.msra.mxu0 %v129
    %223 = vmatprep.subr.mxu0 0.0
    %224 = vmatpush1.msra.mxu0 %v130
    %225 = vmatprep.subr.mxu0 0.0
    %226 = vmatpush1.msra.mxu0 %v131
    %227 = vmatprep.subr.mxu0 0.0
    %228 = vmatpush1.msra.mxu0 %v132
    %229 = vmatprep.subr.mxu0 0.0
    %230 = vmatpush1.msra.mxu0 %v133
    %231 = vmatprep.subr.mxu0 0.0
    %232 = vmatpush1.msra.mxu0 %v134
    %233 = vmatprep.subr.mxu0 0.0
    %234 = vmatpush1.msra.mxu0 %v135
    %235 = vmatprep.subr.mxu0 0.0
    %236 = vmatpush1.msra.mxu0 %v136
    %237 = vmatprep.subr.mxu0 0.0
    %238 = vmatpush1.msra.mxu0 %v137
    %239 = vmatprep.subr.mxu0 0.0
    %240 = vmatpush1.msra.mxu0 %v138
    %241 = vmatprep.subr.mxu0 0.0
    %242 = vmatpush1.msra.mxu0 %v139
    %243 = vmatprep.subr.mxu0 0.0
    %244 = vmatpush1.msra.mxu0 %v140
    %245 = vmatprep.subr.mxu0 0.0
    %246 = vmatpush1.msra.mxu0 %v141
    %247 = vmatprep.subr.mxu0 0.0
    %248 = vmatpush1.msra.mxu0 0.0
    %249 = vmatprep.subr.mxu0 0.0
    %250 = vmatpush1.msra.mxu0 0.0
    %251 = vmatprep.subr.mxu0 0.0
    %252 = vmatpush1.msra.mxu0 0.0
    %253 = vmatprep.subr.mxu0 0.0
    %254 = vmatpush1.msra.mxu0 0.0
    %255 = vmatprep.subr.mxu0 0.0
    %256 = vmatpush1.msra.mxu0 0.0
    %257 = vmatprep.subr.mxu0 0.0
    %258 = vmatpush1.msra.mxu0 0.0
    %259 = vmatprep.subr.mxu0 0.0
    %260 = vmatpush1.msra.mxu0 0.0
    %261 = vmatprep.subr.mxu0 0.0
    %262 = vmatpush1.msra.mxu0 0.0
    %263 = vmatprep.subr.mxu0 0.0
    %264 = vmatpush1.msra.mxu0 0.0
    %265 = vmatprep.subr.mxu0 0.0
    %266 = vmatpush1.msra.mxu0 0.0
    %267 = vmatprep.subr.mxu0 0.0
    %268 = vmatpush1.msra.mxu0 0.0
    %269 = vmatprep.subr.mxu0 0.0
    %270 = vmatpush1.msra.mxu0 0.0
    %271 = vmatprep.subr.mxu0 0.0
    %272 = vmatpush1.msra.mxu0 0.0
    %273 = vmatprep.subr.mxu0 0.0
    %274 = vmatpush1.msra.mxu0 0.0
    %275 = vmatprep.subr.mxu0 0.0
    %276 = vmatpush1.msra.mxu0 0.0
    %277 = vmatprep.subr.mxu0 0.0
    %278 = vmatpush1.msra.mxu0 0.0
    %279 = vmatprep.mubr.f32.mxu0 0.0
    %280 = vmatmul.mubr.f32.gmra.mrb[0].mxu0 %v213
    %v281 = vpop.f32.mrb[0].mxu0
    %v282 = vadd.f32 0.0, %v281
    %v283 = vpop.f32.mrb[0].mxu0
    %284 = vdwg.mxu0
    %v285 = vmul.f32 %v211, 0.5
    %v286 = vmul.f32 %v142, 0.5
    %v287 = vlaneseq
    %v288 = vshrl.u32 %v287, 7
    %v289 = vsub.s32 0, %v288
    %v290 = vrot.slane %v286, %v289
    %v291 = vadd.f32 %v285, %v290
    %v292 = vadd.f32 %v286, 0.25
    %v293 = vlaneseq
    %v294 = vshrl.u32 %v293, 7
    %v295 = vsub.s32 1, %v294
    %v296 = vrot.slane %v292, %v295
    %v297 = vadd.f32 %v285, %v296
    %v298 = vtanh.pop %v291
    %v299 = vmul.f32 %v298, 0.25
    %v300 = vadd.f32 %v297, %v299
    %v301 = vlaneseq
    %v302 = vshrl.u32 %v301, 7
    %v303 = vsub.s32 2, %v302
    %v304 = vrot.slane %v292, %v303
    %v305 = vadd.f32 %v285, %v304
    %v306 = vtanh.pop %v300
    %v307 = vmul.f32 %v306, 0.25
    %v308 = vadd.f32 %v305, %v307
    %v309 = vtanh.pop %v308
    %v310 = vmul.f32 %v309, 0.5
    %v311 = vadd.f32 %v310, 0.5
    %312 = vmatprep.subr.mxu0 0.0
    %313 = vmatpush1.msra.mxu0 %v110
    %314 = vmatprep.subr.mxu0 0.0
    %315 = vmatpush1.msra.mxu0 %v111
    %316 = vmatprep.subr.mxu0 0.0
    %317 = vmatpush1.msra.mxu0 %v112
    %318 = vmatprep.subr.mxu0 0.0
    %319 = vmatpush1.msra.mxu0 %v113
    %320 = vmatprep.subr.mxu0 0.0
    %321 = vmatpush1.msra.mxu0 %v114
    %322 = vmatprep.subr.mxu0 0.0
    %323 = vmatpush1.msra.mxu0 %v115
    %324 = vmatprep.subr.mxu0 0.0
    %325 = vmatpush1.msra.mxu0 %v116
    %326 = vmatprep.subr.mxu0 0.0
    %327 = vmatpush1.msra.mxu0 %v117
    %328 = vmatprep.subr.mxu0 0.0
    %329 = vmatpush1.msra.mxu0 %v118
    %330 = vmatprep.subr.mxu0 0.0
    %331 = vmatpush1.msra.mxu0 %v119
    %332 = vmatprep.subr.mxu0 0.0
    %333 = vmatpush1.msra.mxu0 %v120
    %334 = vmatprep.subr.mxu0 0.0
    %335 = vmatpush1.msra.mxu0 %v121
    %336 = vmatprep.subr.mxu0 0.0
    %337 = vmatpush1.msra.mxu0 %v122
    %338 = vmatprep.subr.mxu0 0.0
    %339 = vmatpush1.msra.mxu0 %v123
    %340 = vmatprep.subr.mxu0 0.0
    %341 = vmatpush1.msra.mxu0 %v124
    %342 = vmatprep.subr.mxu0 0.0
    %343 = vmatpush1.msra.mxu0 %v125
    %344 = vmatprep.subr.mxu0 0.0
    %345 = vmatpush1.msra.mxu0 0.0
    %346 = vmatprep.subr.mxu0 0.0
    %347 = vmatpush1.msra.mxu0 0.0
    %348 = vmatprep.subr.mxu0 0.0
    %349 = vmatpush1.msra.mxu0 0.0
    %350 = vmatprep.subr.mxu0 0.0
    %351 = vmatpush1.msra.mxu0 0.0
    %352 = vmatprep.subr.mxu0 0.0
    %353 = vmatpush1.msra.mxu0 0.0
    %354 = vmatprep.subr.mxu0 0.0
    %355 = vmatpush1.msra.mxu0 0.0
    %356 = vmatprep.subr.mxu0 0.0
    %357 = vmatpush1.msra.mxu0 0.0
    %358 = vmatprep.subr.mxu0 0.0
    %359 = vmatpush1.msra.mxu0 0.0
    %360 = vmatprep.subr.mxu0 0.0
    %361 = vmatpush1.msra.mxu0 0.0
    %362 = vmatprep.subr.mxu0 0.0
    %363 = vmatpush1.msra.mxu0 0.0
    %364 = vmatprep.subr.mxu0 0.0
    %365 = vmatpush1.msra.mxu0 0.0
    %366 = vmatprep.subr.mxu0 0.0
    %367 = vmatpush1.msra.mxu0 0.0
    %368 = vmatprep.subr.mxu0 0.0
    %369 = vmatpush1.msra.mxu0 0.0
    %370 = vmatprep.subr.mxu0 0.0
    %371 = vmatpush1.msra.mxu0 0.0
    %372 = vmatprep.subr.mxu0 0.0
    %373 = vmatpush1.msra.mxu0 0.0
    %374 = vmatprep.subr.mxu0 0.0
    %375 = vmatpush1.msra.mxu0 0.0
    %376 = vmatprep.mubr.f32.mxu0 0.0
    %377 = vmatmul.mubr.f32.gmra.mrb[0].mxu0 %v311
    %v378 = vpop.f32.mrb[0].mxu0
    %v379 = vadd.f32 %v282, %v378
    %v380 = vpop.f32.mrb[0].mxu0
    %381 = vdwg.mxu0
    %v382 = vlaneseq
    %v383 = vshrl.u32 %v382, 7
    %v384 = vsub.s32 0, %v383
    %v385 = vrot.slane %v143, %v384
    %v386 = vadd.f32 %v379, %v385
    %387 = vst [vmem:[#allocation10] sm:$0xff] %v386
    // Predicated region
    $region42: #{tpu_custom_call.1} parent=1 // pred_check
      _
    $region43: #{tpu_custom_call.1} parent=1 // pred_check_branch
      %389 = sbr.rel (0) target = $region45
    $region44: #{tpu_custom_call.1} parent=1 // pred_region
      %s391 = ssub.s32 128, 128
      %392 = vsyncadd [#allocation4], %s391
      %s394 = sshll.u32 [#allocation10], 4
      %s395 = int_to_ptr.vmem [resolvable:$true] %s394
      %397 = dma.vmem_to_hbm [thread:$0]  %s395, 128, %s6, [#allocation4]
    $region45: #{tpu_custom_call.1} parent=1 // pred_fallthru
      _
    // Predicated region
    $region46: #{tpu_custom_call.1} parent=1 // pred_check
      _
    $region47: #{tpu_custom_call.1} parent=1 // pred_check_branch
      %399 = sbr.rel (0) target = $region49
    $region48: #{tpu_custom_call.1} parent=1 // pred_region
      %400 = dma.done [#allocation4], 128
    $region49: #{tpu_custom_call.1} parent=1 // pred_fallthru
      _
    %401 = vsyncpa [#allocation3], 1
    %402 = vsyncpa [#allocation6], 1
    %403 = vsyncpa [#allocation9], 1
    %404 = vsyncpa [#allocation4], 1

// kernel: tpu_custom_call.1
$region0: #{tpu_custom_call.1}
  #allocation0 [shape = 'u32[]', space=smem, size = 0x4, offset = 0x4, fixed_abs, tag = 'smem constant byte address 0x4 - core index']
  #allocation1 [shape = 'u32[144,128]{1,0:T(1,128)}', space=vmem, size = 0x12000, scoped, tag = 'internal scratch']
  %s0 = inlined_call_operand.hbm [shape: f32[8,128], index: 0, kind: input, shape index: {}]
  %s1 = inlined_call_operand.hbm [shape: f32[128,256], index: 1, kind: input, shape index: {}]
  %s2 = inlined_call_operand.hbm [shape: f32[128,128], index: 2, kind: input, shape index: {}]
  %s3 = inlined_call_operand.hbm [shape: f32[128,128], index: 3, kind: input, shape index: {}]
  %s4 = inlined_call_operand.vmem [shape: f32[8,128], index: 4, kind: input, shape index: {}]
  %s5 = inlined_call_operand.vmem [shape: f32[8,128], index: 5, kind: input, shape index: {}]
  %s6 = inlined_call_operand.hbm [shape: f32[8,128], index: 6, kind: output, shape index: {}]
  %s7 = sld [smem:[#allocation0]]
  $region50: #{tpu_custom_call.1} parent=0
    _
  %s9 = ssub.s32 1, %s7
  %s10 = scalar_select 0, %s9, %s7
  $region1: #{tpu_custom_call.1} parent=0
    #allocation2 [shape = 'u8[4096]{0}', space=vmem, size = 0x1000, scoped, tag = 'input window, operand 0, single buffered']
    #allocation3 [shape = 's32[1]{0}', space=sflag, size = 0x4, scoped, tag = 'scoped memory for tpu_custom_call.1']
    #allocation4 [shape = 's32[1]{0}', space=sflag, size = 0x4, scoped, tag = 'scoped memory for tpu_custom_call.1']
    #allocation5 [shape = 'u8[131072]{0}', space=vmem, size = 0x20000, scoped, tag = 'input window, operand 1, single buffered']
    #allocation6 [shape = 's32[1]{0}', space=sflag, size = 0x4, scoped, tag = 'scoped memory for tpu_custom_call.1']
    #allocation7 [shape = 'u8[65536]{0}', space=vmem, size = 0x10000, scoped, tag = 'input window, operand 2, single buffered']
    #allocation8 [shape = 'u8[65536]{0}', space=vmem, size = 0x10000, scoped, tag = 'input window, operand 3, single buffered']
    #allocation9 [shape = 's32[1]{0}', space=sflag, size = 0x4, scoped, tag = 'scoped memory for tpu_custom_call.1']
    #allocation10 [shape = 'u8[4096]{0}', space=vmem, size = 0x1000, scoped, tag = 'output window, operand 0, single buffered']
    %11 = vsyncpa [#allocation3], 0
    %12 = vsyncpa [#allocation6], 0
    %13 = vsyncpa [#allocation9], 0
    %14 = vsyncpa [#allocation4], 0
    // Predicated region
    $region2: #{tpu_custom_call.1} parent=1 // pred_check
      _
    $region3: #{tpu_custom_call.1} parent=1 // pred_check_branch
      %16 = sbr.rel (0) target = $region5
    $region4: #{tpu_custom_call.1} parent=1 // pred_region
      %s18 = ssub.s32 128, 128
      %19 = vsyncadd [#allocation3], %s18
      %s21 = sshll.u32 [#allocation2], 4
      %s22 = int_to_ptr.vmem [resolvable:$true] %s21
      %24 = dma.hbm_to_vmem [thread:$0]  %s0, 128, %s22, [#allocation3]
    $region5: #{tpu_custom_call.1} parent=1 // pred_fallthru
      _
    // Predicated region
    $region6: #{tpu_custom_call.1} parent=1 // pred_check
      _
    $region7: #{tpu_custom_call.1} parent=1 // pred_check_branch
      %26 = sbr.rel (0) target = $region9
    $region8: #{tpu_custom_call.1} parent=1 // pred_region
      %s28 = ssub.s32 4096, 4096
      %29 = vsyncadd [#allocation6], %s28
      %s30 = sshll.u32 [#allocation5], 4
      %s31 = int_to_ptr.vmem [resolvable:$true] %s30
      %36 = dma.hbm_to_vmem [thread:$0]  %s1, 4096, %s31, [#allocation6], 256, 256, 16
    $region9: #{tpu_custom_call.1} parent=1 // pred_fallthru
      _
    // Predicated region
    $region10: #{tpu_custom_call.1} parent=1 // pred_check
      _
    $region11: #{tpu_custom_call.1} parent=1 // pred_check_branch
      %38 = sbr.rel (0) target = $region13
    $region12: #{tpu_custom_call.1} parent=1 // pred_region
      %s40 = ssub.s32 2048, 2048
      %41 = vsyncadd [#allocation6], %s40
      %s42 = sshll.u32 [#allocation7], 4
      %s43 = int_to_ptr.vmem [resolvable:$true] %s42
      %48 = dma.hbm_to_vmem [thread:$0]  %s2, 2048, %s43, [#allocation6], 128, 128, 8
    $region13: #{tpu_custom_call.1} parent=1 // pred_fallthru
      _
    // Predicated region
    $region14: #{tpu_custom_call.1} parent=1 // pred_check
      _
    $region15: #{tpu_custom_call.1} parent=1 // pred_check_branch
      %50 = sbr.rel (0) target = $region17
    $region16: #{tpu_custom_call.1} parent=1 // pred_region
      %s52 = ssub.s32 2048, 2048
      %53 = vsyncadd [#allocation9], %s52
      %s54 = sshll.u32 [#allocation8], 4
      %s55 = int_to_ptr.vmem [resolvable:$true] %s54
      %60 = dma.hbm_to_vmem [thread:$0]  %s3, 2048, %s55, [#allocation9], 128, 128, 8
    $region17: #{tpu_custom_call.1} parent=1 // pred_fallthru
      _
    // Predicated region
    $region18: #{tpu_custom_call.1} parent=1 // pred_check
      _
    $region19: #{tpu_custom_call.1} parent=1 // pred_check_branch
      %62 = sbr.rel (0) target = $region21
    $region20: #{tpu_custom_call.1} parent=1 // pred_region
      _
    $region21: #{tpu_custom_call.1} parent=1 // pred_fallthru
      _
    // Predicated region
    $region22: #{tpu_custom_call.1} parent=1 // pred_check
      _
    $region23: #{tpu_custom_call.1} parent=1 // pred_check_branch
      %64 = sbr.rel (0) target = $region25
    $region24: #{tpu_custom_call.1} parent=1 // pred_region
      _
    $region25: #{tpu_custom_call.1} parent=1 // pred_fallthru
      _
    // Predicated region
    $region26: #{tpu_custom_call.1} parent=1 // pred_check
      _
    $region27: #{tpu_custom_call.1} parent=1 // pred_check_branch
      %66 = sbr.rel (0) target = $region29
    $region28: #{tpu_custom_call.1} parent=1 // pred_region
      %67 = dma.done [#allocation3], 128
    $region29: #{tpu_custom_call.1} parent=1 // pred_fallthru
      _
    // Predicated region
    $region30: #{tpu_custom_call.1} parent=1 // pred_check
      _
    $region31: #{tpu_custom_call.1} parent=1 // pred_check_branch
      %69 = sbr.rel (0) target = $region33
    $region32: #{tpu_custom_call.1} parent=1 // pred_region
      %70 = dma.done [#allocation6], 4096
    $region33: #{tpu_custom_call.1} parent=1 // pred_fallthru
      _
    // Predicated region
    $region34: #{tpu_custom_call.1} parent=1 // pred_check
      _
    $region35: #{tpu_custom_call.1} parent=1 // pred_check_branch
      %72 = sbr.rel (0) target = $region37
    $region36: #{tpu_custom_call.1} parent=1 // pred_region
      %73 = dma.done [#allocation6], 2048
    $region37: #{tpu_custom_call.1} parent=1 // pred_fallthru
      _
    // Predicated region
    $region38: #{tpu_custom_call.1} parent=1 // pred_check
      _
    $region39: #{tpu_custom_call.1} parent=1 // pred_check_branch
      %75 = sbr.rel (0) target = $region41
    $region40: #{tpu_custom_call.1} parent=1 // pred_region
      %76 = dma.done [#allocation9], 2048
    $region41: #{tpu_custom_call.1} parent=1 // pred_fallthru
      _
    %v77 = vld [vmem:[#allocation2] sm:$0xff]
    %v78 = vld [vmem:[#allocation5] sm:$0xff]
    %v79 = vld [vmem:[#allocation5 + $0x8] sm:$0xff]
    %v80 = vld [vmem:[#allocation5 + $0x10] sm:$0xff]
    %v81 = vld [vmem:[#allocation5 + $0x18] sm:$0xff]
    %v82 = vld [vmem:[#allocation5 + $0x20] sm:$0xff]
    %v83 = vld [vmem:[#allocation5 + $0x28] sm:$0xff]
    %v84 = vld [vmem:[#allocation5 + $0x30] sm:$0xff]
    %v85 = vld [vmem:[#allocation5 + $0x38] sm:$0xff]
    %v86 = vld [vmem:[#allocation5 + $0x40] sm:$0xff]
    %v87 = vld [vmem:[#allocation5 + $0x48] sm:$0xff]
    %v88 = vld [vmem:[#allocation5 + $0x50] sm:$0xff]
    %v89 = vld [vmem:[#allocation5 + $0x58] sm:$0xff]
    %v90 = vld [vmem:[#allocation5 + $0x60] sm:$0xff]
    %v91 = vld [vmem:[#allocation5 + $0x68] sm:$0xff]
    %v92 = vld [vmem:[#allocation5 + $0x70] sm:$0xff]
    %v93 = vld [vmem:[#allocation5 + $0x78] sm:$0xff]
    %v94 = vld [vmem:[#allocation5 + $0x80] sm:$0xff]
    %v95 = vld [vmem:[#allocation5 + $0x88] sm:$0xff]
    %v96 = vld [vmem:[#allocation5 + $0x90] sm:$0xff]
    %v97 = vld [vmem:[#allocation5 + $0x98] sm:$0xff]
    %v98 = vld [vmem:[#allocation5 + $0xa0] sm:$0xff]
    %v99 = vld [vmem:[#allocation5 + $0xa8] sm:$0xff]
    %v100 = vld [vmem:[#allocation5 + $0xb0] sm:$0xff]
    %v101 = vld [vmem:[#allocation5 + $0xb8] sm:$0xff]
    %v102 = vld [vmem:[#allocation5 + $0xc0] sm:$0xff]
    %v103 = vld [vmem:[#allocation5 + $0xc8] sm:$0xff]
    %v104 = vld [vmem:[#allocation5 + $0xd0] sm:$0xff]
    %v105 = vld [vmem:[#allocation5 + $0xd8] sm:$0xff]
    %v106 = vld [vmem:[#allocation5 + $0xe0] sm:$0xff]
    %v107 = vld [vmem:[#allocation5 + $0xe8] sm:$0xff]
    %v108 = vld [vmem:[#allocation5 + $0xf0] sm:$0xff]
    %v109 = vld [vmem:[#allocation5 + $0xf8] sm:$0xff]
    %v110 = vld [vmem:[#allocation7] sm:$0xff]
    %v111 = vld [vmem:[#allocation7 + $0x8] sm:$0xff]
    %v112 = vld [vmem:[#allocation7 + $0x10] sm:$0xff]
    %v113 = vld [vmem:[#allocation7 + $0x18] sm:$0xff]
    %v114 = vld [vmem:[#allocation7 + $0x20] sm:$0xff]
    %v115 = vld [vmem:[#allocation7 + $0x28] sm:$0xff]
    %v116 = vld [vmem:[#allocation7 + $0x30] sm:$0xff]
    %v117 = vld [vmem:[#allocation7 + $0x38] sm:$0xff]
    %v118 = vld [vmem:[#allocation7 + $0x40] sm:$0xff]
    %v119 = vld [vmem:[#allocation7 + $0x48] sm:$0xff]
    %v120 = vld [vmem:[#allocation7 + $0x50] sm:$0xff]
    %v121 = vld [vmem:[#allocation7 + $0x58] sm:$0xff]
    %v122 = vld [vmem:[#allocation7 + $0x60] sm:$0xff]
    %v123 = vld [vmem:[#allocation7 + $0x68] sm:$0xff]
    %v124 = vld [vmem:[#allocation7 + $0x70] sm:$0xff]
    %v125 = vld [vmem:[#allocation7 + $0x78] sm:$0xff]
    %v126 = vld [vmem:[#allocation8] sm:$0xff]
    %v127 = vld [vmem:[#allocation8 + $0x8] sm:$0xff]
    %v128 = vld [vmem:[#allocation8 + $0x10] sm:$0xff]
    %v129 = vld [vmem:[#allocation8 + $0x18] sm:$0xff]
    %v130 = vld [vmem:[#allocation8 + $0x20] sm:$0xff]
    %v131 = vld [vmem:[#allocation8 + $0x28] sm:$0xff]
    %v132 = vld [vmem:[#allocation8 + $0x30] sm:$0xff]
    %v133 = vld [vmem:[#allocation8 + $0x38] sm:$0xff]
    %v134 = vld [vmem:[#allocation8 + $0x40] sm:$0xff]
    %v135 = vld [vmem:[#allocation8 + $0x48] sm:$0xff]
    %v136 = vld [vmem:[#allocation8 + $0x50] sm:$0xff]
    %v137 = vld [vmem:[#allocation8 + $0x58] sm:$0xff]
    %v138 = vld [vmem:[#allocation8 + $0x60] sm:$0xff]
    %v139 = vld [vmem:[#allocation8 + $0x68] sm:$0xff]
    %v140 = vld [vmem:[#allocation8 + $0x70] sm:$0xff]
    %v141 = vld [vmem:[#allocation8 + $0x78] sm:$0xff]
    %v142 = vld [vmem:[%s4] sm:$0xff]
    %v143 = vld [vmem:[%s5] sm:$0xff]
    %144 = vmatprep.subr.mxu0 %v79
    %145 = vmatpush1.msra.mxu0 %v78
    %146 = vmatprep.subr.mxu0 %v81
    %147 = vmatpush1.msra.mxu0 %v80
    %148 = vmatprep.subr.mxu0 %v83
    %149 = vmatpush1.msra.mxu0 %v82
    %150 = vmatprep.subr.mxu0 %v85
    %151 = vmatpush1.msra.mxu0 %v84
    %152 = vmatprep.subr.mxu0 %v87
    %153 = vmatpush1.msra.mxu0 %v86
    %154 = vmatprep.subr.mxu0 %v89
    %155 = vmatpush1.msra.mxu0 %v88
    %156 = vmatprep.subr.mxu0 %v91
    %157 = vmatpush1.msra.mxu0 %v90
    %158 = vmatprep.subr.mxu0 %v93
    %159 = vmatpush1.msra.mxu0 %v92
    %160 = vmatprep.subr.mxu0 %v95
    %161 = vmatpush1.msra.mxu0 %v94
    %162 = vmatprep.subr.mxu0 %v97
    %163 = vmatpush1.msra.mxu0 %v96
    %164 = vmatprep.subr.mxu0 %v99
    %165 = vmatpush1.msra.mxu0 %v98
    %166 = vmatprep.subr.mxu0 %v101
    %167 = vmatpush1.msra.mxu0 %v100
    %168 = vmatprep.subr.mxu0 %v103
    %169 = vmatpush1.msra.mxu0 %v102
    %170 = vmatprep.subr.mxu0 %v105
    %171 = vmatpush1.msra.mxu0 %v104
    %172 = vmatprep.subr.mxu0 %v107
    %173 = vmatpush1.msra.mxu0 %v106
    %174 = vmatprep.subr.mxu0 %v109
    %175 = vmatpush1.msra.mxu0 %v108
    %176 = vmatprep.subr.mxu0 0.0
    %177 = vmatpush1.msra.mxu0 0.0
    %178 = vmatprep.subr.mxu0 0.0
    %179 = vmatpush1.msra.mxu0 0.0
    %180 = vmatprep.subr.mxu0 0.0
    %181 = vmatpush1.msra.mxu0 0.0
    %182 = vmatprep.subr.mxu0 0.0
    %183 = vmatpush1.msra.mxu0 0.0
    %184 = vmatprep.subr.mxu0 0.0
    %185 = vmatpush1.msra.mxu0 0.0
    %186 = vmatprep.subr.mxu0 0.0
    %187 = vmatpush1.msra.mxu0 0.0
    %188 = vmatprep.subr.mxu0 0.0
    %189 = vmatpush1.msra.mxu0 0.0
    %190 = vmatprep.subr.mxu0 0.0
    %191 = vmatpush1.msra.mxu0 0.0
    %192 = vmatprep.subr.mxu0 0.0
    %193 = vmatpush1.msra.mxu0 0.0
    %194 = vmatprep.subr.mxu0 0.0
    %195 = vmatpush1.msra.mxu0 0.0
    %196 = vmatprep.subr.mxu0 0.0
    %197 = vmatpush1.msra.mxu0 0.0
    %198 = vmatprep.subr.mxu0 0.0
    %199 = vmatpush1.msra.mxu0 0.0
    %200 = vmatprep.subr.mxu0 0.0
    %201 = vmatpush1.msra.mxu0 0.0
    %202 = vmatprep.subr.mxu0 0.0
    %203 = vmatpush1.msra.mxu0 0.0
    %204 = vmatprep.subr.mxu0 0.0
    %205 = vmatpush1.msra.mxu0 0.0
    %206 = vmatprep.subr.mxu0 0.0
    %207 = vmatpush1.msra.mxu0 0.0
    %208 = vmatprep.mubr.f32.mxu0 0.0
    %209 = vmatmul.mubr.f32.gmra.mrb[0].mxu0 %v77
    %v210 = vpop.f32.mrb[0].mxu0
    %v211 = vadd.f32 0.0, %v210
    %v212 = vpop.f32.mrb[0].mxu0
    %v213 = vadd.f32 0.0, %v212
    %214 = vdwg.mxu0
    %215 = vmatprep.subr.mxu0 0.0
    %216 = vmatpush1.msra.mxu0 %v126
    %217 = vmatprep.subr.mxu0 0.0
    %218 = vmatpush1.msra.mxu0 %v127
    %219 = vmatprep.subr.mxu0 0.0
    %220 = vmatpush1.msra.mxu0 %v128
    %221 = vmatprep.subr.mxu0 0.0
    %222 = vmatpush1.msra.mxu0 %v129
    %223 = vmatprep.subr.mxu0 0.0
    %224 = vmatpush1.msra.mxu0 %v130
    %225 = vmatprep.subr.mxu0 0.0
    %226 = vmatpush1.msra.mxu0 %v131
    %227 = vmatprep.subr.mxu0 0.0
    %228 = vmatpush1.msra.mxu0 %v132
    %229 = vmatprep.subr.mxu0 0.0
    %230 = vmatpush1.msra.mxu0 %v133
    %231 = vmatprep.subr.mxu0 0.0
    %232 = vmatpush1.msra.mxu0 %v134
    %233 = vmatprep.subr.mxu0 0.0
    %234 = vmatpush1.msra.mxu0 %v135
    %235 = vmatprep.subr.mxu0 0.0
    %236 = vmatpush1.msra.mxu0 %v136
    %237 = vmatprep.subr.mxu0 0.0
    %238 = vmatpush1.msra.mxu0 %v137
    %239 = vmatprep.subr.mxu0 0.0
    %240 = vmatpush1.msra.mxu0 %v138
    %241 = vmatprep.subr.mxu0 0.0
    %242 = vmatpush1.msra.mxu0 %v139
    %243 = vmatprep.subr.mxu0 0.0
    %244 = vmatpush1.msra.mxu0 %v140
    %245 = vmatprep.subr.mxu0 0.0
    %246 = vmatpush1.msra.mxu0 %v141
    %247 = vmatprep.subr.mxu0 0.0
    %248 = vmatpush1.msra.mxu0 0.0
    %249 = vmatprep.subr.mxu0 0.0
    %250 = vmatpush1.msra.mxu0 0.0
    %251 = vmatprep.subr.mxu0 0.0
    %252 = vmatpush1.msra.mxu0 0.0
    %253 = vmatprep.subr.mxu0 0.0
    %254 = vmatpush1.msra.mxu0 0.0
    %255 = vmatprep.subr.mxu0 0.0
    %256 = vmatpush1.msra.mxu0 0.0
    %257 = vmatprep.subr.mxu0 0.0
    %258 = vmatpush1.msra.mxu0 0.0
    %259 = vmatprep.subr.mxu0 0.0
    %260 = vmatpush1.msra.mxu0 0.0
    %261 = vmatprep.subr.mxu0 0.0
    %262 = vmatpush1.msra.mxu0 0.0
    %263 = vmatprep.subr.mxu0 0.0
    %264 = vmatpush1.msra.mxu0 0.0
    %265 = vmatprep.subr.mxu0 0.0
    %266 = vmatpush1.msra.mxu0 0.0
    %267 = vmatprep.subr.mxu0 0.0
    %268 = vmatpush1.msra.mxu0 0.0
    %269 = vmatprep.subr.mxu0 0.0
    %270 = vmatpush1.msra.mxu0 0.0
    %271 = vmatprep.subr.mxu0 0.0
    %272 = vmatpush1.msra.mxu0 0.0
    %273 = vmatprep.subr.mxu0 0.0
    %274 = vmatpush1.msra.mxu0 0.0
    %275 = vmatprep.subr.mxu0 0.0
    %276 = vmatpush1.msra.mxu0 0.0
    %277 = vmatprep.subr.mxu0 0.0
    %278 = vmatpush1.msra.mxu0 0.0
    %279 = vmatprep.mubr.f32.mxu0 0.0
    %280 = vmatmul.mubr.f32.gmra.mrb[0].mxu0 %v213
    %v281 = vpop.f32.mrb[0].mxu0
    %v282 = vadd.f32 0.0, %v281
    %v283 = vpop.f32.mrb[0].mxu0
    %284 = vdwg.mxu0
    %v285 = vmul.f32 %v211, 0.5
    %v286 = vmul.f32 %v142, 0.5
    %v287 = vlaneseq
    %v288 = vshrl.u32 %v287, 7
    %v289 = vsub.s32 0, %v288
    %v290 = vrot.slane %v286, %v289
    %v291 = vadd.f32 %v285, %v290
    %v292 = vadd.f32 %v286, 0.25
    %v293 = vlaneseq
    %v294 = vshrl.u32 %v293, 7
    %v295 = vsub.s32 1, %v294
    %v296 = vrot.slane %v292, %v295
    %v297 = vadd.f32 %v285, %v296
    %v298 = vtanh.pop %v291
    %v299 = vmul.f32 %v298, 0.25
    %v300 = vadd.f32 %v297, %v299
    %v301 = vlaneseq
    %v302 = vshrl.u32 %v301, 7
    %v303 = vsub.s32 2, %v302
    %v304 = vrot.slane %v292, %v303
    %v305 = vadd.f32 %v285, %v304
    %v306 = vtanh.pop %v300
    %v307 = vmul.f32 %v306, 0.25
    %v308 = vadd.f32 %v305, %v307
    %v309 = vtanh.pop %v308
    %v310 = vmul.f32 %v309, 0.5
    %v311 = vadd.f32 %v310, 0.5
    %312 = vmatprep.subr.mxu0 0.0
    %313 = vmatpush1.msra.mxu0 %v110
    %314 = vmatprep.subr.mxu0 0.0
    %315 = vmatpush1.msra.mxu0 %v111
    %316 = vmatprep.subr.mxu0 0.0
    %317 = vmatpush1.msra.mxu0 %v112
    %318 = vmatprep.subr.mxu0 0.0
    %319 = vmatpush1.msra.mxu0 %v113
    %320 = vmatprep.subr.mxu0 0.0
    %321 = vmatpush1.msra.mxu0 %v114
    %322 = vmatprep.subr.mxu0 0.0
    %323 = vmatpush1.msra.mxu0 %v115
    %324 = vmatprep.subr.mxu0 0.0
    %325 = vmatpush1.msra.mxu0 %v116
    %326 = vmatprep.subr.mxu0 0.0
    %327 = vmatpush1.msra.mxu0 %v117
    %328 = vmatprep.subr.mxu0 0.0
    %329 = vmatpush1.msra.mxu0 %v118
    %330 = vmatprep.subr.mxu0 0.0
    %331 = vmatpush1.msra.mxu0 %v119
    %332 = vmatprep.subr.mxu0 0.0
    %333 = vmatpush1.msra.mxu0 %v120
    %334 = vmatprep.subr.mxu0 0.0
    %335 = vmatpush1.msra.mxu0 %v121
    %336 = vmatprep.subr.mxu0 0.0
    %337 = vmatpush1.msra.mxu0 %v122
    %338 = vmatprep.subr.mxu0 0.0
    %339 = vmatpush1.msra.mxu0 %v123
    %340 = vmatprep.subr.mxu0 0.0
    %341 = vmatpush1.msra.mxu0 %v124
    %342 = vmatprep.subr.mxu0 0.0
    %343 = vmatpush1.msra.mxu0 %v125
    %344 = vmatprep.subr.mxu0 0.0
    %345 = vmatpush1.msra.mxu0 0.0
    %346 = vmatprep.subr.mxu0 0.0
    %347 = vmatpush1.msra.mxu0 0.0
    %348 = vmatprep.subr.mxu0 0.0
    %349 = vmatpush1.msra.mxu0 0.0
    %350 = vmatprep.subr.mxu0 0.0
    %351 = vmatpush1.msra.mxu0 0.0
    %352 = vmatprep.subr.mxu0 0.0
    %353 = vmatpush1.msra.mxu0 0.0
    %354 = vmatprep.subr.mxu0 0.0
    %355 = vmatpush1.msra.mxu0 0.0
    %356 = vmatprep.subr.mxu0 0.0
    %357 = vmatpush1.msra.mxu0 0.0
    %358 = vmatprep.subr.mxu0 0.0
    %359 = vmatpush1.msra.mxu0 0.0
    %360 = vmatprep.subr.mxu0 0.0
    %361 = vmatpush1.msra.mxu0 0.0
    %362 = vmatprep.subr.mxu0 0.0
    %363 = vmatpush1.msra.mxu0 0.0
    %364 = vmatprep.subr.mxu0 0.0
    %365 = vmatpush1.msra.mxu0 0.0
    %366 = vmatprep.subr.mxu0 0.0
    %367 = vmatpush1.msra.mxu0 0.0
    %368 = vmatprep.subr.mxu0 0.0
    %369 = vmatpush1.msra.mxu0 0.0
    %370 = vmatprep.subr.mxu0 0.0
    %371 = vmatpush1.msra.mxu0 0.0
    %372 = vmatprep.subr.mxu0 0.0
    %373 = vmatpush1.msra.mxu0 0.0
    %374 = vmatprep.subr.mxu0 0.0
    %375 = vmatpush1.msra.mxu0 0.0
    %376 = vmatprep.mubr.f32.mxu0 0.0
    %377 = vmatmul.mubr.f32.gmra.mrb[0].mxu0 %v311
    %v378 = vpop.f32.mrb[0].mxu0
    %v379 = vadd.f32 %v282, %v378
    %v380 = vpop.f32.mrb[0].mxu0
    %381 = vdwg.mxu0
    %v382 = vlaneseq
    %v383 = vshrl.u32 %v382, 7
    %v384 = vsub.s32 0, %v383
    %v385 = vrot.slane %v143, %v384
    %v386 = vadd.f32 %v379, %v385
    %387 = vst [vmem:[#allocation10] sm:$0xff] %v386
    // Predicated region
    $region42: #{tpu_custom_call.1} parent=1 // pred_check
      _
    $region43: #{tpu_custom_call.1} parent=1 // pred_check_branch
      %389 = sbr.rel (0) target = $region45
    $region44: #{tpu_custom_call.1} parent=1 // pred_region
      %s391 = ssub.s32 128, 128
      %392 = vsyncadd [#allocation4], %s391
      %s394 = sshll.u32 [#allocation10], 4
      %s395 = int_to_ptr.vmem [resolvable:$true] %s394
      %397 = dma.vmem_to_hbm [thread:$0]  %s395, 128, %s6, [#allocation4]
    $region45: #{tpu_custom_call.1} parent=1 // pred_fallthru
      _
    // Predicated region
    $region46: #{tpu_custom_call.1} parent=1 // pred_check
      _
    $region47: #{tpu_custom_call.1} parent=1 // pred_check_branch
      %399 = sbr.rel (0) target = $region49
    $region48: #{tpu_custom_call.1} parent=1 // pred_region
      %400 = dma.done [#allocation4], 128
    $region49: #{tpu_custom_call.1} parent=1 // pred_fallthru
      _
    %401 = vsyncpa [#allocation3], 1
    %402 = vsyncpa [#allocation6], 1
    %403 = vsyncpa [#allocation9], 1
    %404 = vsyncpa [#allocation4], 1

</llo_original>
